<compile_context>
chip_gen: v5e
topology: v5e:2x2
jax: 0.10.0
libtpu: 0.0.40
codegen_flags: <defaults>
</compile_context>

<pallas_src>
import functools

import jax
import jax.numpy as jnp
from jax.experimental import pallas as pl
from jax.experimental.pallas import tpu as pltpu


def _round_up(x, m):
    return (x + m - 1) // m * m


def _pick_tile(dim, target, align):
    """Largest multiple of `align` dividing `dim`, <= max(target, align)."""
    if dim <= target:
        return dim
    t = max((target // align) * align, align)
    while t > align and dim % t != 0:
        t -= align
    return t


def _tpu_generation():
    """(mxu_align, physical_vmem_bytes, is_v7, is_v6) — trace-time HW query."""
    kind = ""
    try:
        kind = jax.devices()[0].device_kind.lower()
    except Exception:
        pass
    is_v7 = ("v7" in kind) or ("tpu7" in kind)
    is_v6 = "v6" in kind
    vmem = None
    try:
        vmem = int(pltpu.get_tpu_info().vmem_capacity_bytes)
    except Exception:
        vmem = None
    if vmem is None or vmem <= 0:
        vmem = (64 << 20) if is_v7 else (128 << 20)
    mxu_align = 256 if (is_v6 or is_v7) else 128
    return mxu_align, vmem, is_v7, is_v6


def _ffn_kernel(x_ref, w1_ref, b1_ref, w2_ref, b2_ref, o_ref, *scratch):
    # Grid: (i row tiles ["parallel"], k hidden-dim chunks ["arbitrary", last]).
    #   x_ref  : (tm, C_pad)     w1_ref : (C_pad, tk)   b1_ref : (1, tk)
    #   w2_ref : (tk, C_pad)     b2_ref : (1, C_pad)    o_ref  : (tm, C_pad)
    # When the output dtype is f32, o_ref itself (block index constant across
    # k -> resident) is the accumulator; otherwise a f32 VMEM scratch is used.
    acc_ref = scratch[0] if scratch else o_ref
    k = pl.program_id(1)

    # First matmul on the MXU (operands already in the weight dtype, f32
    # accumulate); bias + ReLU in f32 on the VPU.
    h = jnp.dot(x_ref[...], w1_ref[...], preferred_element_type=jnp.float32)
    h = jnp.maximum(h + b1_ref[...].astype(jnp.float32), 0.0)

    # Partial second matmul over this hidden chunk.  ReLU is elementwise over
    # H, so chunk-wise relu(x@W1_k + b1_k) @ W2_k sums to the exact result.
    part = jnp.dot(h.astype(w2_ref.dtype), w2_ref[...],
                   preferred_element_type=jnp.float32)

    @pl.when(k == 0)
    def _first():                       # write, don't zero-init then RMW
        acc_ref[...] = part.astype(acc_ref.dtype)

    @pl.when(k != 0)
    def _accumulate():
        acc_ref[...] += part.astype(acc_ref.dtype)

    @pl.when(k == pl.num_programs(1) - 1)
    def _finalize():
        o_ref[...] = (acc_ref[...].astype(jnp.float32)
                      + b2_ref[...].astype(jnp.float32)).astype(o_ref.dtype)


@functools.partial(jax.jit, static_argnames=("tm", "tk_h"))
def feed_forward(x, w1, b1, w2, b2, *, tm=None, tk_h=None):
    """y = relu(x @ w1 + b1) @ w2 + b2 (dropout = identity / eval mode).

    x: (..., n_embed).  bf16 weights run the MXU in bf16 with f32 accumulation.
    tm / tk_h = None lets the wrapper pick generation-aware tiles; passing
    tk_h < 4*n_embed forces the streamed-weight (chunked-H) path.
    """
    out_dtype = x.dtype
    orig_shape = x.shape
    C = orig_shape[-1]
    H = w1.shape[1]
    b1 = b1.reshape(1, -1)
    b2 = b2.reshape(1, -1)

    # Cast activations to the weight dtype once (wrapper-side).
    x2d = x.reshape(-1, C).astype(w1.dtype)
    M = x2d.shape[0]

    mxu_align, vmem_phys, is_v7, is_v6 = _tpu_generation()
    budget = int(vmem_phys * 0.72)      # ~46 MiB (v7x) / ~92 MiB (v5e/v6e)

    # Lane-dense / MXU-filling feature padding (zero padding is an exact
    # no-op for this MLP; sliced off at the end).  NOTE: for production-sized
    # models pad the weights once at parameter init instead of per call.
    C_pad = _round_up(C, 128)
    H_pad = _round_up(H, 128)
    if mxu_align == 256:                # 2x256x256 MXU on v6e / v7x
        if C_pad <= 1024 and C_pad % 256:
            C_pad = _round_up(C, 256)
        if H_pad <= 1024 and H_pad % 256:
            H_pad = _round_up(H, 256)

    xb = x2d.dtype.itemsize
    wb = w1.dtype.itemsize
    ob = jnp.dtype(out_dtype).itemsize
    use_scratch = out_dtype != jnp.float32   # f32 outputs accumulate in o_ref

    def est_vmem(tm_e, tk_e, resident):
        w_bufs = 1 if resident else 3        # streamed chunks may be Buffered(3)
        e = 2 * tm_e * C_pad * xb            # x tiles (double-buffered)
        e += 2 * tm_e * C_pad * ob           # out tiles (double-buffered)
        e += w_bufs * C_pad * tk_e * wb      # W1 block(s)
        e += w_bufs * tk_e * C_pad * wb      # W2 block(s)
        e += w_bufs * tk_e * b1.dtype.itemsize
        e += C_pad * b2.dtype.itemsize
        e += tm_e * tk_e * 4                 # f32 hidden intermediate
        if use_scratch:
            e += tm_e * C_pad * 4            # f32 accumulator scratch
        return e

    # --- row tile: generation-aware default, sublane aligned ---
    M_pad8 = _round_up(max(M, 1), 8)
    if tm is not None:
        tm_base = tm
    elif is_v7:
        tm_base = 384                        # 3.2 TB/s HBM -> modest tile is fine
    else:
        tm_base = 512
    tm_eff = min(_round_up(tm_base, 8), M_pad8)
    if is_v7 and tm is None and M_pad8 >= 16:
        # 2 TensorCores share the "parallel" axis: keep at least 2 row tiles.
        tm_eff = min(tm_eff, _round_up((M + 1) // 2, 8))

    # --- hidden dim: fully VMEM-resident weights whenever they fit ---
    force_stream = tk_h is not None and tk_h < H_pad
    resident = (not force_stream) and est_vmem(tm_eff, H_pad, True) <= budget
    if resident:
        tk_eff = H_pad
    else:
        if is_v6 and tm is None:
            # Streamed weights: raise AI (= tm flops/byte) past the v6e roofline.
            tm_eff = min(_round_up(1024, 8), M_pad8)
        tk_align = 256 if (mxu_align == 256 and H_pad % 256 == 0) else 128
        tk_target = tk_h if tk_h is not None else 512
        tk_eff = _pick_tile(H_pad, max(tk_target, tk_align), tk_align)
        while est_vmem(tm_eff, tk_eff, False) > budget and tk_eff > tk_align:
            tk_eff = _pick_tile(H_pad, tk_eff - tk_align, tk_align)
        while est_vmem(tm_eff, tk_eff, False) > budget and tm_eff > 8:
            tm_eff = max(_round_up(tm_eff // 2, 8), 8)

    n_k = H_pad // tk_eff
    M_pad = _round_up(M, tm_eff)             # whole row tiles: no OOB x reads
    n_m = M_pad // tm_eff

    # --- padding (rows to a whole tile, features to padded widths) ---
    if M_pad != M or C_pad != C:
        x2d = jnp.pad(x2d, ((0, M_pad - M), (0, C_pad - C)))
    if C_pad != C or H_pad != H:
        w1 = jnp.pad(w1, ((0, C_pad - C), (0, H_pad - H)))
        b1 = jnp.pad(b1, ((0, 0), (0, H_pad - H)))
        w2 = jnp.pad(w2, ((0, H_pad - H), (0, C_pad - C)))
        b2 = jnp.pad(b2, ((0, 0), (0, C_pad - C)))

    # Buffering: resident weights fetched once; streamed chunks get a deeper
    # pipeline when per-chunk compute is short (small tm).
    if n_k == 1:
        w_mode = pl.Buffered(1)
    elif tm_eff <= 256:
        w_mode = pl.Buffered(3)
    else:
        w_mode = None
    const_mode = pl.Buffered(1)

    est = est_vmem(tm_eff, tk_eff, n_k == 1)
    vmem_limit = int(min(max(est * 3 // 2 + (2 << 20), 8 << 20), budget))

    scratch = [pltpu.VMEM((tm_eff, C_pad), jnp.float32)] if use_scratch else []

    out = pl.pallas_call(
        _ffn_kernel,
        out_shape=jax.ShapeDtypeStruct((M_pad, C_pad), out_dtype),
        grid_spec=pltpu.PrefetchScalarGridSpec(
            num_scalar_prefetch=0,
            grid=(n_m, n_k),                                    # reduction last
            in_specs=[
                pl.BlockSpec((tm_eff, C_pad), lambda i, k: (i, 0)),   # x rows
                pl.BlockSpec((C_pad, tk_eff), lambda i, k: (0, k),    # W1
                             pipeline_mode=w_mode),
                pl.BlockSpec((1, tk_eff), lambda i, k: (0, k),        # b1
                             pipeline_mode=w_mode),
                pl.BlockSpec((tk_eff, C_pad), lambda i, k: (k, 0),    # W2
                             pipeline_mode=w_mode),
                pl.BlockSpec((1, C_pad), lambda i, k: (0, 0),         # b2
                             pipeline_mode=const_mode),
            ],
            out_specs=pl.BlockSpec((tm_eff, C_pad), lambda i, k: (i, 0)),
            scratch_shapes=scratch,
        ),
        compiler_params=pltpu.CompilerParams(
            dimension_semantics=("parallel", "arbitrary"),
            vmem_limit_bytes=vmem_limit,
        ),
    )(x2d, w1, b1, w2, b2)

    return out[:M, :C].reshape(orig_shape)


def init_params(key, n_embed, dtype=jnp.float32):
    """Deterministic init mirroring nn.Linear's U(-1/sqrt(fan_in), 1/sqrt(fan_in))."""
    h = 4 * n_embed
    k1, k2, k3, k4 = jax.random.split(key, 4)
    lim1 = 1.0 / jnp.sqrt(n_embed)
    lim2 = 1.0 / jnp.sqrt(h)
    w1 = jax.random.uniform(k1, (n_embed, h), dtype, -lim1, lim1)
    b1 = jax.random.uniform(k2, (1, h), dtype, -lim1, lim1)
    w2 = jax.random.uniform(k3, (h, n_embed), dtype, -lim2, lim2)
    b2 = jax.random.uniform(k4, (1, n_embed), dtype, -lim2, lim2)
    return w1, b1, w2, b2


if __name__ == "__main__":
    key = jax.random.PRNGKey(0)

    # --- toy config matching the PyTorch module ---
    n_embed = 32            # hidden = 4 * n_embed = 128
    B, T = 2, 8
    dropout = 0.1           # nn.Dropout in eval mode -> identity

    kx, kp = jax.random.split(key)
    x = jax.random.normal(kx, (B, T, n_embed), jnp.float32)
    w1, b1, w2, b2 = init_params(kp, n_embed)

    y = feed_forward(x, w1, b1, w2, b2)
    jax.block_until_ready(y)
    ref = jnp.maximum(x @ w1 + b1[0], 0.0) @ w2 + b2[0]
    assert y.shape == x.shape
    assert jnp.allclose(y, ref, atol=1e-5, rtol=1e-5), "f32 mismatch vs reference"

    # --- bf16 weights/activations: bf16 MXU operands, f32 scratch accumulator ---
    yb = feed_forward(x.astype(jnp.bfloat16), w1.astype(jnp.bfloat16),
                      b1.astype(jnp.bfloat16), w2.astype(jnp.bfloat16),
                      b2.astype(jnp.bfloat16))
    jax.block_until_ready(yb)
    assert jnp.allclose(yb.astype(jnp.float32), ref, atol=7.5e-2, rtol=7.5e-2), \
        "bf16 mismatch vs reference"

    # --- larger, ragged-M config forcing the streamed-weight path
    #     (2 row tiles incl. a padded one, 2 hidden chunks reduced into the
    #     resident f32 output block) ---
    n_embed2 = 128          # hidden = 512
    B2, T2 = 2, 56          # M = 112 (not a multiple of tm=64)
    kx2, kp2 = jax.random.split(jax.random.PRNGKey(1))
    x2 = jax.random.normal(kx2, (B2, T2, n_embed2), jnp.float32)
    p2 = init_params(kp2, n_embed2)
    y2 = feed_forward(x2, *p2, tm=64, tk_h=256)
    jax.block_until_ready(y2)
    ref2 = jnp.maximum(x2 @ p2[0] + p2[1][0], 0.0) @ p2[2] + p2[3][0]
    assert jnp.allclose(y2, ref2, atol=1e-4, rtol=1e-4), \
        "streamed-path mismatch vs reference"

    print("KERNEL_OK")
</pallas_src>

<mosaic_0001>
module attributes {stable_mosaic.version = 11 : i64} {
  func.func @_ffn_kernel(%arg0: i32, %arg1: i32, %arg2: memref<16x128xf32, #tpu.memory_space<vmem>>, %arg3: memref<128x128xf32, #tpu.memory_space<vmem>>, %arg4: memref<1x128xf32, #tpu.memory_space<vmem>>, %arg5: memref<128x128xf32, #tpu.memory_space<vmem>>, %arg6: memref<1x128xf32, #tpu.memory_space<vmem>>, %arg7: memref<16x128xf32, #tpu.memory_space<vmem>>) attributes {dimension_semantics = [#tpu.dimension_semantics<parallel>, #tpu.dimension_semantics<arbitrary>], iteration_bounds = array<i64: 1, 1>, scalar_prefetch = 0 : i64, scratch_operands = 0 : i64, tpu.core_type = #tpu.core_type<tc>, window_params = [{transform_indices = @transform_0, window_bounds = array<i64: 16, 128>}, {pipeline_mode = #tpu.pipeline_mode<synchronous>, transform_indices = @transform_1, window_bounds = array<i64: 128, 128>}, {pipeline_mode = #tpu.pipeline_mode<synchronous>, transform_indices = @transform_2, window_bounds = array<i64: 1, 128>}, {pipeline_mode = #tpu.pipeline_mode<synchronous>, transform_indices = @transform_3, window_bounds = array<i64: 128, 128>}, {pipeline_mode = #tpu.pipeline_mode<synchronous>, transform_indices = @transform_4, window_bounds = array<i64: 1, 128>}, {transform_indices = @transform_5, window_bounds = array<i64: 16, 128>}]} {
    %c0 = arith.constant 0 : index
    %c0_0 = arith.constant 0 : index
    %0 = vector.load %arg2[%c0, %c0_0] : memref<16x128xf32, #tpu.memory_space<vmem>>, vector<16x128xf32>
    %c0_1 = arith.constant 0 : index
    %c0_2 = arith.constant 0 : index
    %1 = vector.load %arg3[%c0_1, %c0_2] : memref<128x128xf32, #tpu.memory_space<vmem>>, vector<128x128xf32>
    %cst = arith.constant dense<0.000000e+00> : vector<16x128xf32>
    %2 = tpu.matmul %0, %1, %cst {dimension_numbers = #tpu.dot_dimension_numbers<[1], [0], [0], [1], [0, 0, 1, 1], [], []>} : vector<16x128xf32>, vector<128x128xf32>, vector<16x128xf32> -> vector<16x128xf32>
    %c0_3 = arith.constant 0 : index
    %c0_4 = arith.constant 0 : index
    %3 = vector.load %arg4[%c0_3, %c0_4] : memref<1x128xf32, #tpu.memory_space<vmem>>, vector<1x128xf32>
    %4 = vector.broadcast %3 : vector<1x128xf32> to vector<16x128xf32>
    %5 = arith.addf %2, %4 : vector<16x128xf32>
    %cst_5 = arith.constant 0.000000e+00 : f32
    %6 = vector.broadcast %cst_5 : f32 to vector<16x128xf32>
    %7 = arith.maximumf %5, %6 : vector<16x128xf32>
    %c0_6 = arith.constant 0 : index
    %c0_7 = arith.constant 0 : index
    %8 = vector.load %arg5[%c0_6, %c0_7] : memref<128x128xf32, #tpu.memory_space<vmem>>, vector<128x128xf32>
    %cst_8 = arith.constant dense<0.000000e+00> : vector<16x128xf32>
    %9 = tpu.matmul %7, %8, %cst_8 {dimension_numbers = #tpu.dot_dimension_numbers<[1], [0], [0], [1], [0, 0, 1, 1], [], []>} : vector<16x128xf32>, vector<128x128xf32>, vector<16x128xf32> -> vector<16x128xf32>
    %c0_i32 = arith.constant 0 : i32
    %10 = arith.cmpi eq, %arg1, %c0_i32 : i32
    %11 = arith.extui %10 : i1 to i32
    %c0_i32_9 = arith.constant 0 : i32
    %12 = arith.cmpi ne, %11, %c0_i32_9 : i32
    scf.if %12 {
      %c0_14 = arith.constant 0 : index
      %c0_15 = arith.constant 0 : index
      %19 = vector.load %arg7[%c0_14, %c0_15] : memref<16x128xf32, #tpu.memory_space<vmem>>, vector<16x128xf32>
      tpu.vector_store %arg7[%c0_14, %c0_15], %9 {strides = array<i32>} : memref<16x128xf32, #tpu.memory_space<vmem>>, vector<16x128xf32>,
    } else {
    }
    %c0_i32_10 = arith.constant 0 : i32
    %13 = arith.cmpi ne, %arg1, %c0_i32_10 : i32
    %14 = arith.extui %13 : i1 to i32
    %c0_i32_11 = arith.constant 0 : i32
    %15 = arith.cmpi ne, %14, %c0_i32_11 : i32
    scf.if %15 {
      %c0_14 = arith.constant 0 : index
      %c0_15 = arith.constant 0 : index
      %19 = vector.load %arg7[%c0_14, %c0_15] : memref<16x128xf32, #tpu.memory_space<vmem>>, vector<16x128xf32>
      %20 = arith.addf %19, %9 : vector<16x128xf32>
      %c0_16 = arith.constant 0 : index
      %c0_17 = arith.constant 0 : index
      %21 = vector.load %arg7[%c0_16, %c0_17] : memref<16x128xf32, #tpu.memory_space<vmem>>, vector<16x128xf32>
      tpu.vector_store %arg7[%c0_16, %c0_17], %20 {strides = array<i32>} : memref<16x128xf32, #tpu.memory_space<vmem>>, vector<16x128xf32>,
    } else {
    }
    %c0_i32_12 = arith.constant 0 : i32
    %16 = arith.cmpi eq, %arg1, %c0_i32_12 : i32
    %17 = arith.extui %16 : i1 to i32
    %c0_i32_13 = arith.constant 0 : i32
    %18 = arith.cmpi ne, %17, %c0_i32_13 : i32
    scf.if %18 {
      %c0_14 = arith.constant 0 : index
      %c0_15 = arith.constant 0 : index
      %19 = vector.load %arg7[%c0_14, %c0_15] : memref<16x128xf32, #tpu.memory_space<vmem>>, vector<16x128xf32>
      %c0_16 = arith.constant 0 : index
      %c0_17 = arith.constant 0 : index
      %20 = vector.load %arg6[%c0_16, %c0_17] : memref<1x128xf32, #tpu.memory_space<vmem>>, vector<1x128xf32>
      %21 = vector.broadcast %20 : vector<1x128xf32> to vector<16x128xf32>
      %22 = arith.addf %19, %21 : vector<16x128xf32>
      %c0_18 = arith.constant 0 : index
      %c0_19 = arith.constant 0 : index
      %23 = vector.load %arg7[%c0_18, %c0_19] : memref<16x128xf32, #tpu.memory_space<vmem>>, vector<16x128xf32>
      tpu.vector_store %arg7[%c0_18, %c0_19], %22 {strides = array<i32>} : memref<16x128xf32, #tpu.memory_space<vmem>>, vector<16x128xf32>,
    } else {
    }
    return
  }
  func.func @transform_0(%arg0: i32, %arg1: i32) -> (i32, i32) {
    %c0_i32 = arith.constant 0 : i32
    %c0_i32_0 = arith.constant 0 : i32
    return %arg0, %c0_i32 : i32, i32
  }
  func.func @transform_1(%arg0: i32, %arg1: i32) -> (i32, i32) {
    %c0_i32 = arith.constant 0 : i32
    %c0_i32_0 = arith.constant 0 : i32
    return %c0_i32, %arg1 : i32, i32
  }
  func.func @transform_2(%arg0: i32, %arg1: i32) -> (i32, i32) {
    %c0_i32 = arith.constant 0 : i32
    %c0_i32_0 = arith.constant 0 : i32
    return %c0_i32, %arg1 : i32, i32
  }
  func.func @transform_3(%arg0: i32, %arg1: i32) -> (i32, i32) {
    %c0_i32 = arith.constant 0 : i32
    %c0_i32_0 = arith.constant 0 : i32
    return %arg1, %c0_i32 : i32, i32
  }
  func.func @transform_4(%arg0: i32, %arg1: i32) -> (i32, i32) {
    %c0_i32 = arith.constant 0 : i32
    %c0_i32_0 = arith.constant 0 : i32
    %c0_i32_1 = arith.constant 0 : i32
    return %c0_i32, %c0_i32_0 : i32, i32
  }
  func.func @transform_5(%arg0: i32, %arg1: i32) -> (i32, i32) {
    %c0_i32 = arith.constant 0 : i32
    %c0_i32_0 = arith.constant 0 : i32
    return %arg0, %c0_i32 : i32, i32
  }
}

</mosaic_0001>

<llo_original>
// kernel: feed_forward.1
$region0: #{feed_forward.1}
  #allocation0 [shape = 'u32[]', space=smem, size = 0x4, offset = 0x4, fixed_abs, tag = 'smem constant byte address 0x4 - core index']
  #allocation1 [shape = 'u32[72,128]{1,0:T(1,128)}', space=vmem, size = 0x9000, scoped, tag = 'internal scratch']
  %s0 = inlined_call_operand.vmem [shape: f32[16,128], index: 0, kind: input, shape index: {}]
  %s1 = inlined_call_operand.vmem [shape: f32[128,128], index: 1, kind: input, shape index: {}]
  %s2 = inlined_call_operand.vmem [shape: f32[1,128], index: 2, kind: input, shape index: {}]
  %s3 = inlined_call_operand.vmem [shape: f32[128,128], index: 3, kind: input, shape index: {}]
  %s4 = inlined_call_operand.vmem [shape: f32[1,128], index: 4, kind: input, shape index: {}]
  %s5 = inlined_call_operand.vmem [shape: f32[16,128], index: 5, kind: output, shape index: {}]
  %s6 = sld [smem:[#allocation0]]
  $region42: #{feed_forward.1} parent=0
    _
  %s8 = ssub.s32 1, %s6
  %s9 = scalar_select 0, %s8, %s6
  // Predicated region
  $region2: #{feed_forward.1} parent=0 // pred_check
    _
  $region3: #{feed_forward.1} parent=0 // pred_check_branch
    %11 = sbr.rel (0) target = $region5
  $region4: #{feed_forward.1} parent=0 // pred_region
    _
  $region5: #{feed_forward.1} parent=0 // pred_fallthru
    _
  // Predicated region
  $region6: #{feed_forward.1} parent=0 // pred_check
    _
  $region7: #{feed_forward.1} parent=0 // pred_check_branch
    %13 = sbr.rel (0) target = $region9
  $region8: #{feed_forward.1} parent=0 // pred_region
    _
  $region9: #{feed_forward.1} parent=0 // pred_fallthru
    _
  // Predicated region
  $region10: #{feed_forward.1} parent=0 // pred_check
    _
  $region11: #{feed_forward.1} parent=0 // pred_check_branch
    %15 = sbr.rel (0) target = $region13
  $region12: #{feed_forward.1} parent=0 // pred_region
    _
  $region13: #{feed_forward.1} parent=0 // pred_fallthru
    _
  // Predicated region
  $region14: #{feed_forward.1} parent=0 // pred_check
    _
  $region15: #{feed_forward.1} parent=0 // pred_check_branch
    %17 = sbr.rel (0) target = $region17
  $region16: #{feed_forward.1} parent=0 // pred_region
    _
  $region17: #{feed_forward.1} parent=0 // pred_fallthru
    _
  // Predicated region
  $region18: #{feed_forward.1} parent=0 // pred_check
    _
  $region19: #{feed_forward.1} parent=0 // pred_check_branch
    %19 = sbr.rel (0) target = $region21
  $region20: #{feed_forward.1} parent=0 // pred_region
    _
  $region21: #{feed_forward.1} parent=0 // pred_fallthru
    _
  %v20 = vld [vmem:[%s0] sm:$0xff]
  %v21 = vld [vmem:[%s0 + $0x8] sm:$0xff]
  %v22 = vld [vmem:[%s1] sm:$0xff]
  %v23 = vld [vmem:[%s1 + $0x8] sm:$0xff]
  %v24 = vld [vmem:[%s1 + $0x10] sm:$0xff]
  %v25 = vld [vmem:[%s1 + $0x18] sm:$0xff]
  %v26 = vld [vmem:[%s1 + $0x20] sm:$0xff]
  %v27 = vld [vmem:[%s1 + $0x28] sm:$0xff]
  %v28 = vld [vmem:[%s1 + $0x30] sm:$0xff]
  %v29 = vld [vmem:[%s1 + $0x38] sm:$0xff]
  %v30 = vld [vmem:[%s1 + $0x40] sm:$0xff]
  %v31 = vld [vmem:[%s1 + $0x48] sm:$0xff]
  %v32 = vld [vmem:[%s1 + $0x50] sm:$0xff]
  %v33 = vld [vmem:[%s1 + $0x58] sm:$0xff]
  %v34 = vld [vmem:[%s1 + $0x60] sm:$0xff]
  %v35 = vld [vmem:[%s1 + $0x68] sm:$0xff]
  %v36 = vld [vmem:[%s1 + $0x70] sm:$0xff]
  %v37 = vld [vmem:[%s1 + $0x78] sm:$0xff]
  %v38 = vld [vmem:[%s2] sm:$0x1]
  %v40 = vperm.slane %v38, 0
  %42 = vmatpush.msra.mxu0 %v37
  %43 = vmatpush.msra.mxu0 %v36
  %44 = vmatpush.msra.mxu0 %v35
  %45 = vmatpush.msra.mxu0 %v34
  %46 = vmatpush.msra.mxu0 %v33
  %47 = vmatpush.msra.mxu0 %v32
  %48 = vmatpush.msra.mxu0 %v31
  %49 = vmatpush.msra.mxu0 %v30
  %50 = vmatpush.msra.mxu0 %v29
  %51 = vmatpush.msra.mxu0 %v28
  %52 = vmatpush.msra.mxu0 %v27
  %53 = vmatpush.msra.mxu0 %v26
  %54 = vmatpush.msra.mxu0 %v25
  %55 = vmatpush.msra.mxu0 %v24
  %56 = vmatpush.msra.mxu0 %v23
  %57 = vmatpush.msra.mxu0 %v22
  %58 = vmatmul.f32.gmra.mxu0 %v20
  %v59 = vpop.f32.mrf.mxu0
  %v60 = vadd.f32 %v40, %v59
  %61 = vmatmul.f32.gmra.mxu0 %v21
  %v62 = vpop.f32.mrf.mxu0
  %v63 = vadd.f32 %v40, %v62
  %64 = vdwg.mxu0
  %v65 = vmax.f32 %v60, 0.0
  %v66 = vmax.f32 %v63, 0.0
  %v67 = vld [vmem:[%s3] sm:$0xff]
  %v68 = vld [vmem:[%s3 + $0x8] sm:$0xff]
  %v69 = vld [vmem:[%s3 + $0x10] sm:$0xff]
  %v70 = vld [vmem:[%s3 + $0x18] sm:$0xff]
  %v71 = vld [vmem:[%s3 + $0x20] sm:$0xff]
  %v72 = vld [vmem:[%s3 + $0x28] sm:$0xff]
  %v73 = vld [vmem:[%s3 + $0x30] sm:$0xff]
  %v74 = vld [vmem:[%s3 + $0x38] sm:$0xff]
  %v75 = vld [vmem:[%s3 + $0x40] sm:$0xff]
  %v76 = vld [vmem:[%s3 + $0x48] sm:$0xff]
  %v77 = vld [vmem:[%s3 + $0x50] sm:$0xff]
  %v78 = vld [vmem:[%s3 + $0x58] sm:$0xff]
  %v79 = vld [vmem:[%s3 + $0x60] sm:$0xff]
  %v80 = vld [vmem:[%s3 + $0x68] sm:$0xff]
  %v81 = vld [vmem:[%s3 + $0x70] sm:$0xff]
  %v82 = vld [vmem:[%s3 + $0x78] sm:$0xff]
  %83 = vmatpush.msra.mxu0 %v82
  %84 = vmatpush.msra.mxu0 %v81
  %85 = vmatpush.msra.mxu0 %v80
  %86 = vmatpush.msra.mxu0 %v79
  %87 = vmatpush.msra.mxu0 %v78
  %88 = vmatpush.msra.mxu0 %v77
  %89 = vmatpush.msra.mxu0 %v76
  %90 = vmatpush.msra.mxu0 %v75
  %91 = vmatpush.msra.mxu0 %v74
  %92 = vmatpush.msra.mxu0 %v73
  %93 = vmatpush.msra.mxu0 %v72
  %94 = vmatpush.msra.mxu0 %v71
  %95 = vmatpush.msra.mxu0 %v70
  %96 = vmatpush.msra.mxu0 %v69
  %97 = vmatpush.msra.mxu0 %v68
  %98 = vmatpush.msra.mxu0 %v67
  %99 = vmatmul.f32.gmra.mxu0 %v65
  %v100 = vpop.f32.mrf.mxu0
  %v101 = vadd.f32 0.0, %v100
  %102 = vmatmul.f32.gmra.mxu0 %v66
  %v103 = vpop.f32.mrf.mxu0
  %v104 = vadd.f32 0.0, %v103
  %105 = vdwg.mxu0
  %p106 = scmp.eq.s32.totalorder 0, 0
  // Predicated region
  $region22: #{feed_forward.1} parent=0 // pred_check
    %p107 = pneg %p106
  $region23: #{feed_forward.1} parent=0 // pred_check_branch
    %109 = sbr.rel (%p107) target = $region25
  $region24: #{feed_forward.1} parent=0 // pred_region
    %110 = vst [vmem:[%s5] sm:$0xff] %v101
    %111 = vst [vmem:[%s5 + $0x8] sm:$0xff] %v104
  $region25: #{feed_forward.1} parent=0 // pred_fallthru
    _
  %p112 = scmp.ne.s32.totalorder 0, 0
  // Predicated region
  $region26: #{feed_forward.1} parent=0 // pred_check
    %p113 = pneg %p112
  $region27: #{feed_forward.1} parent=0 // pred_check_branch
    %115 = sbr.rel (%p113) target = $region29
  $region28: #{feed_forward.1} parent=0 // pred_region
    %v116 = vld [vmem:[%s5] sm:$0xff]
    %v117 = vld [vmem:[%s5 + $0x8] sm:$0xff]
    %v118 = vadd.f32 %v116, %v101
    %v119 = vadd.f32 %v117, %v104
    %120 = vst [vmem:[%s5] sm:$0xff] %v118
    %121 = vst [vmem:[%s5 + $0x8] sm:$0xff] %v119
  $region29: #{feed_forward.1} parent=0 // pred_fallthru
    _
  // Predicated region
  $region30: #{feed_forward.1} parent=0 // pred_check
    %p122 = pneg %p106
  $region31: #{feed_forward.1} parent=0 // pred_check_branch
    %124 = sbr.rel (%p122) target = $region33
  $region32: #{feed_forward.1} parent=0 // pred_region
    %v125 = vld [vmem:[%s5] sm:$0xff]
    %v126 = vld [vmem:[%s5 + $0x8] sm:$0xff]
    %v127 = vld [vmem:[%s4] sm:$0x1]
    %v129 = vperm.slane %v127, 0
    %v131 = vadd.f32 %v125, %v129
    %v132 = vadd.f32 %v126, %v129
    %133 = vst [vmem:[%s5] sm:$0xff] %v131
    %134 = vst [vmem:[%s5 + $0x8] sm:$0xff] %v132
  $region33: #{feed_forward.1} parent=0 // pred_fallthru
    _
  // Predicated region
  $region34: #{feed_forward.1} parent=0 // pred_check
    _
  $region35: #{feed_forward.1} parent=0 // pred_check_branch
    %136 = sbr.rel (0) target = $region37
  $region36: #{feed_forward.1} parent=0 // pred_region
    _
  $region37: #{feed_forward.1} parent=0 // pred_fallthru
    _
  // Predicated region
  $region38: #{feed_forward.1} parent=0 // pred_check
    _
  $region39: #{feed_forward.1} parent=0 // pred_check_branch
    %138 = sbr.rel (0) target = $region41
  $region40: #{feed_forward.1} parent=0 // pred_region
    _
  $region41: #{feed_forward.1} parent=0 // pred_fallthru
    _

</llo_original>
